<compile_context>
chip_gen: v7x
topology: tpu7x:2x2x1
jax: 0.10.0
libtpu: 0.0.40
codegen_flags: <defaults>
</compile_context>

<pallas_src>
import functools

import jax
import jax.numpy as jnp
from jax.experimental import pallas as pl
from jax.experimental.pallas import tpu as pltpu


def feature_gating_kernel(seq_ref, uproj_ref, w1t_ref, o_ref):
    # seq_ref  : (TS, E)  sequence rows for this (batch, seq-tile)
    # uproj_ref: (1, E)   user @ W2^T + b for this batch (broadcast over TS)
    # w1t_ref  : (E, E)   W1^T, grid-invariant (stays resident in VMEM)
    # o_ref    : (TS, E)
    seq = seq_ref[...]
    proj = jnp.dot(seq, w1t_ref[...], preferred_element_type=jnp.float32)   # MXU
    gate = jax.nn.sigmoid(proj + uproj_ref[...].astype(jnp.float32))        # VPU + EUP
    o_ref[...] = (seq.astype(jnp.float32) * gate).astype(o_ref.dtype)


@functools.partial(jax.jit, static_argnames=("ts", "stream_dtype"))
def feature_gating(seq_item_embedding, user_embedding, w1, w2, b,
                   *, ts=512, stream_dtype=None):
    """
    seq_item_embedding: (B, S, E) float32
    user_embedding:     (B, E)    float32
    w1, w2:             (E, E)    nn.Linear weights, layout (out, in)
    b:                  (E,)
    ts:                 sequence-tile size (rows per grid step); 512 suits all
                        generations (v5e included) unless VMEM forces smaller.
    stream_dtype:       optional narrower dtype (e.g. jnp.bfloat16) for the
                        seq / W1^T / u_proj input streams on v6e/v7x.
    """
    B, S, E = seq_item_embedding.shape
    out_dtype = seq_item_embedding.dtype
    s_dtype = jnp.dtype(stream_dtype) if stream_dtype is not None else jnp.dtype(out_dtype)

    # Hoisted per-batch user projection + bias: one tiny XLA matmul, (B, 1, E).
    u_proj = (user_embedding @ w2.T + b).reshape(B, 1, E)
    w1t = w1.T

    if s_dtype != jnp.dtype(out_dtype):
        seq_in = seq_item_embedding.astype(s_dtype)
        u_proj = u_proj.astype(s_dtype)
        w1t = w1t.astype(s_dtype)
    else:
        seq_in = seq_item_embedding

    # Sequence-tile size: full S, or a multiple of 8 (partial last block OK).
    TS = S if S <= ts else max(8, (ts // 8) * 8)

    in_bytes = s_dtype.itemsize
    out_bytes = jnp.dtype(out_dtype).itemsize

    # Per-generation VMEM budget (v7x: 64 MiB/core; v5e/v6e: 128 MiB).
    try:
        vmem_cap = int(pltpu.get_tpu_info().vmem_capacity_bytes)
    except Exception:
        vmem_cap = 64 * 1024 * 1024
    vmem_budget = (vmem_cap * 3) // 4

    # W1^T is grid-invariant; single-buffer it once it is big enough to matter
    # (keeps large-E configs inside v7x's 64 MiB).
    single_buffer_w1 = 2 * E * E * in_bytes > (8 * 1024 * 1024)

    def _vmem_estimate(tile):
        seq_buf = 2 * tile * E * in_bytes          # double-buffered seq tile
        out_buf = 2 * tile * E * out_bytes         # double-buffered out tile
        up_buf = 2 * E * in_bytes                  # user-projection row
        w1_buf = (1 if single_buffer_w1 else 2) * E * E * in_bytes
        f32_tmp = 2 * tile * E * 4                 # proj / gate temporaries
        return seq_buf + out_buf + up_buf + w1_buf + f32_tmp

    while _vmem_estimate(TS) > vmem_budget and TS > 8:
        TS = max(8, (TS // 2) // 8 * 8)

    grid = (B, pl.cdiv(S, TS))

    if single_buffer_w1:
        w1t_spec = pl.BlockSpec((E, E), lambda bi, si: (0, 0),
                                pipeline_mode=pl.Buffered(1))
    else:
        w1t_spec = pl.BlockSpec((E, E), lambda bi, si: (0, 0))

    cost = pl.CostEstimate(
        flops=2 * B * S * E * E,
        transcendentals=B * S * E,
        bytes_accessed=(B * S * E * (in_bytes + out_bytes)
                        + B * E * in_bytes + E * E * in_bytes),
    )

    # TODO(synk): if bf16 + large E ever makes this MXU-bound, add an N-tiled
    # (256-wide) output axis and a K-tiling axis for W1^T.
    out = pl.pallas_call(
        feature_gating_kernel,
        out_shape=jax.ShapeDtypeStruct((B, S, E), out_dtype),
        grid=grid,
        in_specs=[
            pl.BlockSpec((None, TS, E), lambda bi, si: (bi, si, 0)),  # seq tile
            pl.BlockSpec((None, 1, E), lambda bi, si: (bi, 0, 0)),    # u_proj row
            w1t_spec,                                                 # W1^T resident
        ],
        out_specs=pl.BlockSpec((None, TS, E), lambda bi, si: (bi, si, 0)),
        compiler_params=pltpu.CompilerParams(
            dimension_semantics=("parallel", "parallel"),
            vmem_limit_bytes=int(min(vmem_budget,
                                     max(2 * _vmem_estimate(TS),
                                         16 * 1024 * 1024))),
        ),
        cost_estimate=cost,
    )(seq_in, u_proj, w1t)

    return out


def feature_gating_ref(seq_item_embedding, user_embedding, w1, w2, b):
    # Pure-JAX reference mirroring the PyTorch module.
    s_proj = jnp.einsum("bse,oe->bso", seq_item_embedding, w1)
    u_proj = jnp.einsum("be,oe->bo", user_embedding, w2)[:, None, :]
    gate = jax.nn.sigmoid(s_proj + u_proj + b)
    return seq_item_embedding * gate


if __name__ == "__main__":
    B, S, E = 2, 8, 32
    key = jax.random.PRNGKey(0)
    k_seq, k_user, k_w1, k_w2 = jax.random.split(key, 4)

    seq_item = jax.random.normal(k_seq, (B, S, E), dtype=jnp.float32)
    user = jax.random.normal(k_user, (B, E), dtype=jnp.float32)
    # nn.Linear-style weights, layout (out_features, in_features).
    w1 = jax.random.normal(k_w1, (E, E), dtype=jnp.float32) * 0.1
    w2 = jax.random.normal(k_w2, (E, E), dtype=jnp.float32) * 0.1
    b = jnp.zeros((E,), dtype=jnp.float32)  # nn.Parameter(torch.zeros(E))

    ref = feature_gating_ref(seq_item, user, w1, w2, b)

    # f32 streams: matches PyTorch numerics.
    out = jax.block_until_ready(feature_gating(seq_item, user, w1, w2, b))
    assert out.shape == (B, S, E)
    assert jnp.allclose(out, ref, atol=1e-4, rtol=1e-4), "mismatch vs reference (f32)"

    # bf16 input streams (v6e/v7x fast path): f32 accumulation + f32 gating.
    out_bf16 = jax.block_until_ready(
        feature_gating(seq_item, user, w1, w2, b, stream_dtype=jnp.bfloat16))
    assert out_bf16.shape == (B, S, E)
    assert jnp.allclose(out_bf16, ref, atol=5e-2, rtol=5e-2), "mismatch vs reference (bf16)"

    print("KERNEL_OK")
</pallas_src>

<mosaic_0001>
module attributes {stable_mosaic.version = 11 : i64} {
  func.func @feature_gating_kernel(%arg0: i32, %arg1: i32, %arg2: memref<1x8x32xf32, #tpu.memory_space<vmem>>, %arg3: memref<1x1x32xf32, #tpu.memory_space<vmem>>, %arg4: memref<32x32xf32, #tpu.memory_space<vmem>>, %arg5: memref<1x8x32xf32, #tpu.memory_space<vmem>>) attributes {dimension_semantics = [#tpu.dimension_semantics<parallel>, #tpu.dimension_semantics<parallel>], iteration_bounds = array<i64: 2, 1>, scalar_prefetch = 0 : i64, scratch_operands = 0 : i64, tpu.core_type = #tpu.core_type<tc>, window_params = [{transform_indices = @transform_0, window_bounds = array<i64: 1, 8, 32>}, {transform_indices = @transform_1, window_bounds = array<i64: 1, 1, 32>}, {pipeline_mode = #tpu.pipeline_mode<synchronous>, transform_indices = @transform_2, window_bounds = array<i64: 32, 32>}, {transform_indices = @transform_3, window_bounds = array<i64: 1, 8, 32>}]} {
    %c0 = arith.constant 0 : index
    %c0_0 = arith.constant 0 : index
    %c0_1 = arith.constant 0 : index
    %0 = vector.load %arg2[%c0, %c0_0, %c0_1] : memref<1x8x32xf32, #tpu.memory_space<vmem>>, vector<1x8x32xf32>
    %1 = vector.shape_cast %0 : vector<1x8x32xf32> to vector<8x32xf32>
    %c0_2 = arith.constant 0 : index
    %c0_3 = arith.constant 0 : index
    %2 = vector.load %arg4[%c0_2, %c0_3] : memref<32x32xf32, #tpu.memory_space<vmem>>, vector<32x32xf32>
    %cst = arith.constant dense<0.000000e+00> : vector<8x32xf32>
    %3 = tpu.matmul %1, %2, %cst {dimension_numbers = #tpu.dot_dimension_numbers<[1], [0], [0], [1], [0, 0, 1, 1], [], []>} : vector<8x32xf32>, vector<32x32xf32>, vector<8x32xf32> -> vector<8x32xf32>
    %c0_4 = arith.constant 0 : index
    %c0_5 = arith.constant 0 : index
    %c0_6 = arith.constant 0 : index
    %4 = vector.load %arg3[%c0_4, %c0_5, %c0_6] : memref<1x1x32xf32, #tpu.memory_space<vmem>>, vector<1x1x32xf32>
    %5 = vector.shape_cast %4 : vector<1x1x32xf32> to vector<1x32xf32>
    %6 = vector.broadcast %5 : vector<1x32xf32> to vector<8x32xf32>
    %7 = arith.addf %3, %6 : vector<8x32xf32>
    %8 = arith.negf %7 : vector<8x32xf32>
    %9 = math.exp %8 : vector<8x32xf32>
    %cst_7 = arith.constant 1.000000e+00 : f32
    %10 = vector.broadcast %cst_7 : f32 to vector<8x32xf32>
    %11 = arith.addf %10, %9 : vector<8x32xf32>
    %12 = arith.divf %10, %11 : vector<8x32xf32>
    %13 = arith.mulf %1, %12 : vector<8x32xf32>
    %c0_8 = arith.constant 0 : index
    %c0_9 = arith.constant 0 : index
    %c0_10 = arith.constant 0 : index
    %14 = vector.load %arg5[%c0_8, %c0_9, %c0_10] : memref<1x8x32xf32, #tpu.memory_space<vmem>>, vector<1x8x32xf32>
    %15 = vector.shape_cast %14 : vector<1x8x32xf32> to vector<8x32xf32>
    %16 = vector.shape_cast %13 : vector<8x32xf32> to vector<1x8x32xf32>
    tpu.vector_store %arg5[%c0_8, %c0_9, %c0_10], %16 {strides = array<i32>} : memref<1x8x32xf32, #tpu.memory_space<vmem>>, vector<1x8x32xf32>,
    return
  }
  func.func @transform_0(%arg0: i32, %arg1: i32) -> (i32, i32, i32) {
    %c0_i32 = arith.constant 0 : i32
    %c0_i32_0 = arith.constant 0 : i32
    return %arg0, %arg1, %c0_i32 : i32, i32, i32
  }
  func.func @transform_1(%arg0: i32, %arg1: i32) -> (i32, i32, i32) {
    %c0_i32 = arith.constant 0 : i32
    %c0_i32_0 = arith.constant 0 : i32
    %c0_i32_1 = arith.constant 0 : i32
    return %arg0, %c0_i32, %c0_i32_0 : i32, i32, i32
  }
  func.func @transform_2(%arg0: i32, %arg1: i32) -> (i32, i32) {
    %c0_i32 = arith.constant 0 : i32
    %c0_i32_0 = arith.constant 0 : i32
    %c0_i32_1 = arith.constant 0 : i32
    return %c0_i32, %c0_i32_0 : i32, i32
  }
  func.func @transform_3(%arg0: i32, %arg1: i32) -> (i32, i32, i32) {
    %c0_i32 = arith.constant 0 : i32
    %c0_i32_0 = arith.constant 0 : i32
    return %arg0, %arg1, %c0_i32 : i32, i32, i32
  }
}

</mosaic_0001>

<llo_original>
// kernel: feature_gating.1
$region0: #{feature_gating.1}
  #allocation0 [shape = 'u32[]', space=smem, size = 0x4, offset = 0x4, fixed_abs, tag = 'smem constant byte address 0x4 - core index']
  #allocation1 [shape = 'u32[144,128]{1,0:T(1,128)}', space=vmem, size = 0x12000, scoped, tag = 'internal scratch']
  %s0 = inlined_call_operand.vmem [shape: f32[2,8,32], index: 0, kind: input, shape index: {}]
  %s1 = inlined_call_operand.vmem [shape: f32[2,1,32], index: 1, kind: input, shape index: {}]
  %s2 = inlined_call_operand.vmem [shape: f32[32,32], index: 2, kind: input, shape index: {}]
  %s3 = inlined_call_operand.hbm [shape: f32[2,8,32], index: 3, kind: output, shape index: {}]
  %s4 = sld [smem:[#allocation0]]
  $region45: #{feature_gating.1} parent=0
    _
  %s6 = ssub.s32 1, %s4
  %s7 = scalar_select 0, %s6, %s4
  $region1: #{feature_gating.1} parent=0
    #allocation2 [shape = 'u8[8192]{0}', space=vmem, size = 0x2000, scoped, tag = 'output window, operand 0']
    #allocation3 [shape = 's32[2]{0}', space=sflag, size = 0x8, scoped, tag = 'scoped memory for feature_gating.1']
    %8 = vsyncpa [#allocation3], 0
    %s9 = scalar_lea.sflag [#allocation3], 1
    %10 = vsyncpa %s9, 0
    loop: start=0, step=1, limit=4
    $region2: #{feature_gating.1} parent=1 // loop_pre_header
      _
    $region3: #{feature_gating.1} parent=1 // loop_header
      %s12 = sphi 0, %s16
      %p13 = scmp.ge.s32.totalorder %s12, 4
      %s19 = sphi 0, %s31
      %s20 = sphi 0, %s27
      %s21 = sphi 0, %s19
      %s22 = sphi 0, %s20
      %s23 = sphi 0, %s21
      %s24 = sphi 0, %s22
      %s36 = sphi 0, %s38
      %s39 = sphi 0, %s36
      %s40 = sphi 0, %s39
      %s56 = sphi 0, %s40
      %s62 = sphi 0, %s64
      %s65 = sphi 0, %s62
      %s66 = sphi 0, %s65
      %s82 = sphi 0, %s66
      %s86 = sphi 0, %s86
      %s88 = sphi 0, %s86
      %s89 = sphi 0, %s88
      %s103 = sphi 0, %s89
      %s111 = sphi 0, %s113
      %s114 = sphi 0, %s111
      %s115 = sphi 0, %s114
      %s131 = sphi 0, %s115
    $region4: #{feature_gating.1} parent=1 // loop_header_branch
      %15 = sbr.rel (%p13) target = $region8
    $region5: #{feature_gating.1} parent=1 // loop_body
      %s17 = ssub.s32 %s12, 1
      %s18 = ssub.s32 %s12, 2
      %s25 = sadd.s32 1, %s20
      %p26 = scmp.ge.s32.totalorder %s25, 1
      %s27 = scalar_select %p26, 0, %s25
      %s28 = sadd.s32 1, %s19
      %s29 = scalar_select %p26, %s28, %s19
      %p30 = scmp.ge.s32.totalorder %s29, 2
      %s31 = scalar_select %p30, 0, %s29
      %s32 = ssub.s32 %s19, %s31
      %s33 = ssub.s32 %s20, %s27
      %s34 = sor.u32 %s32, %s33
      %p35 = scmp.eq.s32.totalorder %s34, 0
      %s37 = sadd.s32 %s36, 1
      %s38 = scalar_select %p35, %s36, %s37
      %p41 = pneg %p35
      %p42 = scmp.eq.s32.totalorder %s12, 1
      %p43 = por %p41, %p42
      %p44 = scmp.ne.s32.totalorder %s36, %s39
      %p45 = scmp.eq.s32.totalorder %s12, 0
      %p46 = por %p44, %p45
      %p47 = scmp.ne.s32.totalorder %s36, %s39
      %p48 = scmp.eq.s32.totalorder %s17, 1
      %p49 = por %p47, %p48
      %p50 = scmp.ne.s32.totalorder %s39, %s40
      %p51 = scmp.eq.s32.totalorder %s17, 0
      %p52 = por %p50, %p51
      %p53 = scmp.ne.s32.totalorder %s39, %s40
      %p54 = scmp.eq.s32.totalorder %s18, 1
      %p55 = por %p53, %p54
      %p57 = scmp.ne.s32.totalorder %s40, %s56
      %p58 = scmp.eq.s32.totalorder %s18, 0
      %p59 = por %p57, %p58
      %s60 = ssub.s32 %s19, %s31
      %p61 = scmp.eq.s32.totalorder %s60, 0
      %s63 = sadd.s32 %s62, 1
      %s64 = scalar_select %p61, %s62, %s63
      %p67 = pneg %p61
      %p68 = scmp.eq.s32.totalorder %s12, 1
      %p69 = por %p67, %p68
      %p70 = scmp.ne.s32.totalorder %s62, %s65
      %p71 = scmp.eq.s32.totalorder %s12, 0
      %p72 = por %p70, %p71
      %p73 = scmp.ne.s32.totalorder %s62, %s65
      %p74 = scmp.eq.s32.totalorder %s17, 1
      %p75 = por %p73, %p74
      %p76 = scmp.ne.s32.totalorder %s65, %s66
      %p77 = scmp.eq.s32.totalorder %s17, 0
      %p78 = por %p76, %p77
      %p79 = scmp.ne.s32.totalorder %s65, %s66
      %p80 = scmp.eq.s32.totalorder %s18, 1
      %p81 = por %p79, %p80
      %p83 = scmp.ne.s32.totalorder %s66, %s82
      %p84 = scmp.eq.s32.totalorder %s18, 0
      %p85 = por %p83, %p84
      %s87 = sadd.s32 %s86, 1
      %p90 = scmp.eq.s32.totalorder %s12, 1
      %p91 = scmp.ne.s32.totalorder %s86, %s88
      %p92 = scmp.eq.s32.totalorder %s12, 0
      %p93 = por %p91, %p92
      %p94 = scmp.ne.s32.totalorder %s86, %s88
      %p95 = scmp.eq.s32.totalorder %s17, 1
      %p96 = por %p94, %p95
      %p97 = scmp.ne.s32.totalorder %s88, %s89
      %p98 = scmp.eq.s32.totalorder %s17, 0
      %p99 = por %p97, %p98
      %p100 = scmp.ne.s32.totalorder %s88, %s89
      %p101 = scmp.eq.s32.totalorder %s18, 1
      %p102 = por %p100, %p101
      %p104 = scmp.ne.s32.totalorder %s89, %s103
      %p105 = scmp.eq.s32.totalorder %s18, 0
      %p106 = por %p104, %p105
      %s107 = ssub.s32 %s19, %s31
      %s108 = ssub.s32 %s20, %s27
      %s109 = sor.u32 %s107, %s108
      %p110 = scmp.eq.s32.totalorder %s109, 0
      %s112 = sadd.s32 %s111, 1
      %s113 = scalar_select %p110, %s111, %s112
      %p116 = pneg %p110
      %p117 = scmp.eq.s32.totalorder %s12, 1
      %p118 = por %p116, %p117
      %p119 = scmp.ne.s32.totalorder %s111, %s114
      %p120 = scmp.eq.s32.totalorder %s12, 0
      %p121 = por %p119, %p120
      %p122 = scmp.ne.s32.totalorder %s111, %s114
      %p123 = scmp.eq.s32.totalorder %s17, 1
      %p124 = por %p122, %p123
      %p125 = scmp.ne.s32.totalorder %s114, %s115
      %p126 = scmp.eq.s32.totalorder %s17, 0
      %p127 = por %p125, %p126
      %p128 = scmp.ne.s32.totalorder %s114, %s115
      %p129 = scmp.eq.s32.totalorder %s18, 1
      %p130 = por %p128, %p129
      %p132 = scmp.ne.s32.totalorder %s115, %s131
      %p133 = scmp.eq.s32.totalorder %s18, 0
      %p134 = por %p132, %p133
      %p135 = scmp.le.s32.totalorder 1, %s12
      %p136 = scmp.lt.s32.totalorder %s12, 3
      %p137 = pnand %p135, %p136
      %p138 = pneg %p137
      // Predicated region
      $region9: #{feature_gating.1} parent=5 // pred_check
        _
      $region10: #{feature_gating.1} parent=5 // pred_check_branch
        %140 = sbr.rel (%p137) target = $region12
      $region11: #{feature_gating.1} parent=5 // pred_region
        %s141 = ssub.s32 %s12, 1
        // Predicated region
        $region13: #{feature_gating.1} parent=11 // pred_check
          %p142 = pneg %p99
        $region14: #{feature_gating.1} parent=11 // pred_check_branch
          %144 = sbr.rel (%p142) target = $region16
        $region15: #{feature_gating.1} parent=11 // pred_region
          _
        $region16: #{feature_gating.1} parent=11 // pred_fallthru
          _
      $region12: #{feature_gating.1} parent=5 // pred_fallthru
        _
      %p145 = scmp.lt.s32.totalorder %s12, 2
      // Predicated region
      $region17: #{feature_gating.1} parent=5 // pred_check
        %p146 = pneg %p145
      $region18: #{feature_gating.1} parent=5 // pred_check_branch
        %148 = sbr.rel (%p146) target = $region20
      $region19: #{feature_gating.1} parent=5 // pred_region
        // Predicated region
        $region21: #{feature_gating.1} parent=19 // pred_check
          %p149 = pneg %p46
        $region22: #{feature_gating.1} parent=19 // pred_check_branch
          %151 = sbr.rel (%p149) target = $region24
        $region23: #{feature_gating.1} parent=19 // pred_region
          %p152 = scmp.lt.s32.totalorder %s19, 1
          %s153 = scalar_select %p152, %s19, 1
          %p154 = scmp.lt.s32.totalorder %s20, 0
          %s155 = scalar_select %p154, %s20, 0
          %s156 = sadd.s32 %s155, %s153
          %s157 = smul.addr %s156, 8
          %s158 = scalar_lea.vmem %s0, %s157
        $region24: #{feature_gating.1} parent=19 // pred_fallthru
          _
        // Predicated region
        $region25: #{feature_gating.1} parent=19 // pred_check
          %p159 = pneg %p72
        $region26: #{feature_gating.1} parent=19 // pred_check_branch
          %161 = sbr.rel (%p159) target = $region28
        $region27: #{feature_gating.1} parent=19 // pred_region
          %p162 = scmp.lt.s32.totalorder %s19, 1
          %s163 = scalar_select %p162, %s19, 1
          %s164 = scalar_lea.vmem %s1, %s163
        $region28: #{feature_gating.1} parent=19 // pred_fallthru
          _
      $region20: #{feature_gating.1} parent=5 // pred_fallthru
        _
      %p165 = scmp.le.s32.totalorder 1, %s12
      %p166 = scmp.lt.s32.totalorder %s12, 3
      %p167 = pnand %p165, %p166
      %p168 = pneg %p167
      // Predicated region
      $region29: #{feature_gating.1} parent=5 // pred_check
        _
      $region30: #{feature_gating.1} parent=5 // pred_check_branch
        %170 = sbr.rel (%p167) target = $region32
      $region31: #{feature_gating.1} parent=5 // pred_region
        %s171 = ssub.s32 %s12, 1
        %p172 = scmp.lt.s32.totalorder %s21, 1
        %s173 = scalar_select %p172, %s21, 1
        %p174 = scmp.lt.s32.totalorder %s22, 0
        %s175 = scalar_select %p174, %s22, 0
        %s176 = sadd.s32 %s175, %s173
        %s177 = smul.addr %s176, 8
        %s178 = scalar_lea.vmem %s0, %s177
        %p179 = pneg %p52
        %p180 = pneg %p49
        %p181 = scmp.lt.s32.totalorder %s21, 1
        %s182 = scalar_select %p181, %s21, 1
        %s183 = scalar_lea.vmem %s1, %s182
        %p184 = pneg %p78
        %p185 = pneg %p75
        %p186 = pneg %p99
        %p187 = pneg %p96
        %p188 = pneg %p127
        %p189 = pneg %p124
        %s190 = sand.u32 %s114, 1
        %s191 = scalar_lea.sflag [#allocation3], %s190
        %s192 = sand.u32 %s114, 1
        %s193 = smul.addr %s192, 8
        %s194 = scalar_lea.vmem [#allocation2], %s193
        %p195 = scmp.lt.s32.totalorder %s21, 1
        %s196 = scalar_select %p195, %s21, 1
        %p197 = scmp.lt.s32.totalorder %s22, 0
        %s198 = scalar_select %p197, %s22, 0
        %s199 = sadd.s32 %s198, %s196
        %s200 = smul.addr %s199, 8
        %s201 = scalar_lea.vmem %s0, %s200
        %p202 = scmp.lt.s32.totalorder %s21, 1
        %s203 = scalar_select %p202, %s21, 1
        %s204 = scalar_lea.vmem %s1, %s203
        %v205 = vld [vmem:[%s201] sm:$0xff]
        %v206 = vld [vmem:[%s2] sm:$0xff]
        %v207 = vld [vmem:[%s2 + $0x8] sm:$0xff]
        %v208 = vld [vmem:[%s2 + $0x10] sm:$0xff]
        %v209 = vld [vmem:[%s2 + $0x18] sm:$0xff]
        %v210 = vld [vmem:[%s204] sm:$0x1]
        %v212 = vlaneseq
        %v213 = vshrl.u32 %v212, 7
        %v214 = vsub.s32 0, %v213
        %v215 = vrot.slane %v210, %v214
        %vm217 = vcmask 261120
        %v219 = vsel %vm217, %v205, 0
        %221 = vmatprep.subr.mxu0 0.0
        %222 = vmatpush1.msra.mxu0 %v206
        %223 = vmatprep.subr.mxu0 0.0
        %224 = vmatpush1.msra.mxu0 %v207
        %225 = vmatprep.subr.mxu0 0.0
        %226 = vmatpush1.msra.mxu0 %v208
        %227 = vmatprep.subr.mxu0 0.0
        %228 = vmatpush1.msra.mxu0 %v209
        %229 = vmatprep.subr.mxu0 0.0
        %230 = vmatpush1.msra.mxu0 0.0
        %231 = vmatprep.subr.mxu0 0.0
        %232 = vmatpush1.msra.mxu0 0.0
        %233 = vmatprep.subr.mxu0 0.0
        %234 = vmatpush1.msra.mxu0 0.0
        %235 = vmatprep.subr.mxu0 0.0
        %236 = vmatpush1.msra.mxu0 0.0
        %237 = vmatprep.subr.mxu0 0.0
        %238 = vmatpush1.msra.mxu0 0.0
        %239 = vmatprep.subr.mxu0 0.0
        %240 = vmatpush1.msra.mxu0 0.0
        %241 = vmatprep.subr.mxu0 0.0
        %242 = vmatpush1.msra.mxu0 0.0
        %243 = vmatprep.subr.mxu0 0.0
        %244 = vmatpush1.msra.mxu0 0.0
        %245 = vmatprep.subr.mxu0 0.0
        %246 = vmatpush1.msra.mxu0 0.0
        %247 = vmatprep.subr.mxu0 0.0
        %248 = vmatpush1.msra.mxu0 0.0
        %249 = vmatprep.subr.mxu0 0.0
        %250 = vmatpush1.msra.mxu0 0.0
        %251 = vmatprep.subr.mxu0 0.0
        %252 = vmatpush1.msra.mxu0 0.0
        %253 = vmatprep.subr.mxu0 0.0
        %254 = vmatpush1.msra.mxu0 0.0
        %255 = vmatprep.subr.mxu0 0.0
        %256 = vmatpush1.msra.mxu0 0.0
        %257 = vmatprep.subr.mxu0 0.0
        %258 = vmatpush1.msra.mxu0 0.0
        %259 = vmatprep.subr.mxu0 0.0
        %260 = vmatpush1.msra.mxu0 0.0
        %261 = vmatprep.subr.mxu0 0.0
        %262 = vmatpush1.msra.mxu0 0.0
        %263 = vmatprep.subr.mxu0 0.0
        %264 = vmatpush1.msra.mxu0 0.0
        %265 = vmatprep.subr.mxu0 0.0
        %266 = vmatpush1.msra.mxu0 0.0
        %267 = vmatprep.subr.mxu0 0.0
        %268 = vmatpush1.msra.mxu0 0.0
        %269 = vmatprep.subr.mxu0 0.0
        %270 = vmatpush1.msra.mxu0 0.0
        %271 = vmatprep.subr.mxu0 0.0
        %272 = vmatpush1.msra.mxu0 0.0
        %273 = vmatprep.subr.mxu0 0.0
        %274 = vmatpush1.msra.mxu0 0.0
        %275 = vmatprep.subr.mxu0 0.0
        %276 = vmatpush1.msra.mxu0 0.0
        %277 = vmatprep.subr.mxu0 0.0
        %278 = vmatpush1.msra.mxu0 0.0
        %279 = vmatprep.subr.mxu0 0.0
        %280 = vmatpush1.msra.mxu0 0.0
        %281 = vmatprep.subr.mxu0 0.0
        %282 = vmatpush1.msra.mxu0 0.0
        %283 = vmatprep.subr.mxu0 0.0
        %284 = vmatpush1.msra.mxu0 0.0
        %285 = vmatprep.mubr.f32.mxu0 0.0
        %286 = vmatmul.mubr.f32.gmra.mrb[0].mxu0 %v219
        %v287 = vpop.f32.mrb[0].mxu0
        %v288 = vadd.f32 %v215, %v287
        %v289 = vpop.f32.mrb[0].mxu0
        %290 = vdwg.mxu0
        %v291 = vxor.u32 %v288, 2147483648
        %v292 = vmul.f32 %v291, 1.442695
        %v293 = vpow.pop %v292
        %v294 = vadd.f32 %v293, 1.0
        %v295 = vrcp.pop %v294
        %v296 = vmul.f32 1.0, %v295
        %v297 = vmul.f32 %v205, %v296
        %298 = vst.msk [vmem:[%s194] sm:$0xff] %vm217, %v297
        %s299 = sand.u32 %s114, 1
        %s300 = scalar_lea.sflag [#allocation3], %s299
        %s301 = sand.u32 %s114, 1
        %s302 = smul.addr %s301, 8
        %s303 = scalar_lea.vmem [#allocation2], %s302
        // Predicated region
        $region33: #{feature_gating.1} parent=31 // pred_check
          %p304 = pneg %p124
        $region34: #{feature_gating.1} parent=31 // pred_check_branch
          %306 = sbr.rel (%p304) target = $region36
        $region35: #{feature_gating.1} parent=31 // pred_region
          %s308 = ssub.s32 128, 128
          %309 = vsyncadd %s300, %s308
          %s310 = sadd.s32 %s22, %s21
          %s311 = smul.addr %s310, 128
          %s312 = scalar_lea.hbm %s3, %s311
          %s314 = sshll.u32 %s303, 4
          %s315 = int_to_ptr.vmem [resolvable:$true] %s314
          %317 = dma.vmem_to_hbm [thread:$0]  %s315, 128, %s312, %s300
        $region36: #{feature_gating.1} parent=31 // pred_fallthru
          _
      $region32: #{feature_gating.1} parent=5 // pred_fallthru
        _
      %p318 = scmp.le.s32.totalorder 2, %s12
      // Predicated region
      $region37: #{feature_gating.1} parent=5 // pred_check
        %p319 = pneg %p318
      $region38: #{feature_gating.1} parent=5 // pred_check_branch
        %321 = sbr.rel (%p319) target = $region40
      $region39: #{feature_gating.1} parent=5 // pred_region
        %s322 = ssub.s32 %s12, 2
        // Predicated region
        $region41: #{feature_gating.1} parent=39 // pred_check
          %p323 = pneg %p130
        $region42: #{feature_gating.1} parent=39 // pred_check_branch
          %325 = sbr.rel (%p323) target = $region44
        $region43: #{feature_gating.1} parent=39 // pred_region
          %s326 = sand.u32 %s115, 1
          %s327 = scalar_lea.sflag [#allocation3], %s326
          %s328 = sand.u32 %s115, 1
          %s329 = smul.addr %s328, 8
          %s330 = scalar_lea.vmem [#allocation2], %s329
          %331 = dma.done %s327, 128
        $region44: #{feature_gating.1} parent=39 // pred_fallthru
          _
      $region40: #{feature_gating.1} parent=5 // pred_fallthru
        _
    $region6: #{feature_gating.1} parent=1 // loop_footer
      %s16 = sadd.s32 1, %s12
    $region7: #{feature_gating.1} parent=1 // loop_footer_branch
      %11 = sbr.rel target = $region3
    $region8: #{feature_gating.1} parent=1 // loop_exit
      _
    %332 = vsyncpa [#allocation3], 1
    %s333 = scalar_lea.sflag [#allocation3], 1
    %334 = vsyncpa %s333, 1

</llo_original>
